<compile_context>
chip_gen: v6e
topology: v6e:2x2x1
jax: 0.10.0
libtpu: 0.0.40
codegen_flags: <defaults>
</compile_context>

<pallas_src>
import functools

import jax
import jax.numpy as jnp
from jax.experimental import pallas as pl
from jax.experimental.pallas import tpu as pltpu


# ---------------------------------------------------------------------------
# helpers
# ---------------------------------------------------------------------------
def _round_up(x, m):
    return ((x + m - 1) // m) * m


def _sublane_pack(dtype):
    # 8 rows for 32-bit, 16 for bf16/fp16, 32 for 8-bit dtypes.
    return max(8, 32 // jnp.dtype(dtype).itemsize)


def _ce_tile_rows(n_rows, vocab, dtype):
    """Largest sublane-aligned row tile with ~4 MiB of logits per block."""
    pack = _sublane_pack(dtype)
    itemsize = jnp.dtype(dtype).itemsize
    target_block_bytes = 4 * 1024 * 1024
    t = (target_block_bytes // max(vocab * itemsize, 1)) // pack * pack
    t = max(t, pack)
    t = min(t, 1024)
    t = min(t, _round_up(n_rows, pack))
    return t


# ---------------------------------------------------------------------------
# Kernel 1: masked cross-entropy.
#   Outputs are resident vector accumulators (per-row loss / valid-count
#   partial sums per parallel slice); final reduction done in JAX.
# ---------------------------------------------------------------------------
def _ce_kernel(logits_ref, tgt_ref, sum_ref, cnt_ref, *,
               ignore_index, label_smoothing, tile_rows, inner_blocks, n_rows):
    p = pl.program_id(0)          # parallel slice (megacore)
    j = pl.program_id(1)          # reduction step

    @pl.when(j == 0)
    def _():
        sum_ref[...] = jnp.zeros_like(sum_ref)
        cnt_ref[...] = jnp.zeros_like(cnt_ref)

    x = logits_ref[...].astype(jnp.float32)          # (tile_rows, V)
    t = tgt_ref[...]                                 # (tile_rows, 1) int32

    # Row validity: masks the ragged tail of the array and any overshoot of
    # the parallel split.  Out-of-bounds rows may contain garbage (even NaN);
    # jnp.where (select) discards them exactly.
    base = (p * inner_blocks + j) * tile_rows
    row_ids = base + jax.lax.broadcasted_iota(jnp.int32, (tile_rows, 1), 0)
    valid = jnp.logical_and(row_ids < n_rows, t != ignore_index)

    m = jnp.max(x, axis=-1, keepdims=True)
    lse = m + jnp.log(jnp.sum(jnp.exp(x - m), axis=-1, keepdims=True))

    vocab_ids = jax.lax.broadcasted_iota(jnp.int32, x.shape, 1)
    tgt_logit = jnp.sum(jnp.where(vocab_ids == t, x, 0.0), axis=-1, keepdims=True)

    nll = lse - tgt_logit                                # -log p(target)
    smooth = lse - jnp.mean(x, axis=-1, keepdims=True)   # mean_c -log p(c)
    loss = (1.0 - label_smoothing) * nll + label_smoothing * smooth

    sum_ref[...] += jnp.where(valid, loss, 0.0)
    cnt_ref[...] += jnp.where(valid, 1.0, 0.0)


def token_cross_entropy(logits, targets, *, ignore_index=-100,
                        label_smoothing=0.0, parallel_splits=2):
    B, S, V = logits.shape
    n_rows = B * S
    x = logits.reshape(n_rows, V)                    # native dtype, no copy/cast
    t = targets.reshape(n_rows, 1).astype(jnp.int32)

    tile_rows = _ce_tile_rows(n_rows, V, x.dtype)
    n_blocks = pl.cdiv(n_rows, tile_rows)
    P = max(1, min(parallel_splits, n_blocks))       # 2-way split for v7x megacore
    inner_blocks = pl.cdiv(n_blocks, P)

    block_bytes = tile_rows * V * jnp.dtype(x.dtype).itemsize
    vmem_limit = max(32 * 1024 * 1024, 2 * block_bytes + (4 << 20))

    def in_idx(p, j):
        # Clamp so overshooting grid points re-read the last block (their
        # contribution is masked out by the row-validity check in the kernel).
        return (jnp.minimum(p * inner_blocks + j, n_blocks - 1), 0)

    kernel = functools.partial(
        _ce_kernel, ignore_index=ignore_index, label_smoothing=label_smoothing,
        tile_rows=tile_rows, inner_blocks=inner_blocks, n_rows=n_rows)

    sum_out, cnt_out = pl.pallas_call(
        kernel,
        out_shape=(jax.ShapeDtypeStruct((P * tile_rows, 1), jnp.float32),
                   jax.ShapeDtypeStruct((P * tile_rows, 1), jnp.float32)),
        grid_spec=pltpu.PrefetchScalarGridSpec(
            num_scalar_prefetch=0,
            grid=(P, inner_blocks),
            in_specs=[pl.BlockSpec((tile_rows, V), in_idx),
                      pl.BlockSpec((tile_rows, 1), in_idx)],
            out_specs=(pl.BlockSpec((tile_rows, 1), lambda p, j: (p, 0)),
                       pl.BlockSpec((tile_rows, 1), lambda p, j: (p, 0)))),
        compiler_params=pltpu.CompilerParams(
            dimension_semantics=("parallel", "arbitrary"),
            vmem_limit_bytes=vmem_limit),
    )(x, t)

    loss_sum = jnp.sum(sum_out)
    count = jnp.sum(cnt_out)
    # PyTorch would return NaN for all-ignored targets; we clamp to avoid 0/0.
    return loss_sum / jnp.maximum(count, 1.0)


# ---------------------------------------------------------------------------
# Kernel 2: memory consistency (sum over rows of ||after - before||_2)
# ---------------------------------------------------------------------------
# TODO(synk): D sits on lanes (D/128 lane utilization); acceptable since the
#             memory tensor is tiny relative to the logits.
def _mem_kernel(before_ref, after_ref, out_ref, *, tile_rows, n_rows):
    i = pl.program_id(0)

    @pl.when(i == 0)
    def _():
        out_ref[...] = jnp.zeros_like(out_ref)

    d = after_ref[...].astype(jnp.float32) - before_ref[...].astype(jnp.float32)
    norms = jnp.sqrt(jnp.sum(d * d, axis=-1, keepdims=True))

    row_ids = i * tile_rows + jax.lax.broadcasted_iota(jnp.int32, (tile_rows, 1), 0)
    out_ref[...] += jnp.where(row_ids < n_rows, norms, 0.0)


def memory_consistency_loss(memory_before, memory_after, weight):
    B, M, D = memory_before.shape
    n_rows = B * M
    mb = memory_before.reshape(n_rows, D)            # native dtype, no cast
    ma = memory_after.reshape(n_rows, D)

    pack = max(_sublane_pack(mb.dtype), _sublane_pack(ma.dtype))
    tile_rows = min(512, _round_up(n_rows, pack))
    grid = pl.cdiv(n_rows, tile_rows)

    kernel = functools.partial(_mem_kernel, tile_rows=tile_rows, n_rows=n_rows)
    out = pl.pallas_call(
        kernel,
        out_shape=jax.ShapeDtypeStruct((tile_rows, 1), jnp.float32),
        grid_spec=pltpu.PrefetchScalarGridSpec(
            num_scalar_prefetch=0,
            grid=(grid,),
            in_specs=[pl.BlockSpec((tile_rows, D), lambda i: (i, 0)),
                      pl.BlockSpec((tile_rows, D), lambda i: (i, 0))],
            out_specs=pl.BlockSpec((tile_rows, 1), lambda i: (0, 0))),
        compiler_params=pltpu.CompilerParams(
            dimension_semantics=("arbitrary",)),
    )(mb, ma)
    return (jnp.sum(out) / float(n_rows)) * weight


# ---------------------------------------------------------------------------
# Kernel 3: attention entropy.  The global sum is linear in the elements, so
# the tensor is flattened to a lane-dense [rows, 128] layout (zero padding is
# exact: 0 * log(0 + eps) == 0) and accumulated elementwise.
# ---------------------------------------------------------------------------
def _attn_kernel(attn_ref, out_ref):
    @pl.when(pl.program_id(0) == 0)
    def _():
        out_ref[...] = jnp.zeros_like(out_ref)

    a = attn_ref[...].astype(jnp.float32)
    out_ref[...] += -(a * jnp.log(a + 1e-10))


def attention_entropy_loss(attention_weights, weight):
    B, H, Q, K = attention_weights.shape
    n_elems = B * H * Q * K
    lanes = 128

    flat = attention_weights.reshape(-1)             # native dtype, no cast
    pack = _sublane_pack(flat.dtype)
    rows = pl.cdiv(n_elems, lanes)
    tile_rows = min(512, _round_up(rows, pack))
    padded_rows = _round_up(rows, tile_rows)

    pad = padded_rows * lanes - n_elems
    if pad:  # zero padding contributes exactly 0 to the entropy sum
        flat = jnp.concatenate([flat, jnp.zeros((pad,), flat.dtype)])
    a2 = flat.reshape(padded_rows, lanes)
    grid = padded_rows // tile_rows

    out = pl.pallas_call(
        _attn_kernel,
        out_shape=jax.ShapeDtypeStruct((tile_rows, lanes), jnp.float32),
        grid_spec=pltpu.PrefetchScalarGridSpec(
            num_scalar_prefetch=0,
            grid=(grid,),
            in_specs=[pl.BlockSpec((tile_rows, lanes), lambda i: (i, 0))],
            out_specs=pl.BlockSpec((tile_rows, lanes), lambda i: (0, 0))),
        compiler_params=pltpu.CompilerParams(
            dimension_semantics=("arbitrary",)),
    )(a2)
    return (jnp.sum(out) / float(B * H * Q)) * weight


# ---------------------------------------------------------------------------
# TTMLoss wrapper (mirrors the PyTorch module's forward, eos_token=None path)
# ---------------------------------------------------------------------------
class TTMLoss:
    def __init__(self, eos_token=None, ignore_index=-100, reduction="mean",
                 label_smoothing=0.0, include_eos=True,
                 memory_loss_weight=0.0, attention_loss_weight=0.0):
        assert eos_token is None, "TODO(synk): EOSCrossEntropyLoss path not implemented"
        assert reduction == "mean", "TODO(synk): only reduction='mean' implemented"
        self.ignore_index = ignore_index
        self.label_smoothing = label_smoothing
        self.memory_loss_weight = memory_loss_weight
        self.attention_loss_weight = attention_loss_weight

    def __call__(self, logits, targets, memory_before=None, memory_after=None,
                 attention_weights=None):
        token_loss = token_cross_entropy(
            logits, targets, ignore_index=self.ignore_index,
            label_smoothing=self.label_smoothing)

        memory_loss = jnp.float32(0.0)
        if (memory_before is not None and memory_after is not None
                and self.memory_loss_weight > 0.0):
            memory_loss = memory_consistency_loss(
                memory_before, memory_after, self.memory_loss_weight)

        attention_loss = jnp.float32(0.0)
        if attention_weights is not None and self.attention_loss_weight > 0.0:
            attention_loss = attention_entropy_loss(
                attention_weights, self.attention_loss_weight)

        return token_loss + memory_loss + attention_loss


# ---------------------------------------------------------------------------
# Example / smoke test
# ---------------------------------------------------------------------------
if __name__ == "__main__":
    key = jax.random.PRNGKey(0)
    k1, k2, k3, k4, k5 = jax.random.split(key, 5)

    B, S, V = 2, 8, 32          # logits [B, S, V], targets [B, S]
    M, D = 4, 16                # memory [B, M, D]
    H, Q, K = 2, 8, 8           # attention [B, H, Q, K]

    logits = jax.random.normal(k1, (B, S, V), dtype=jnp.float32)
    targets = jax.random.randint(k2, (B, S), 0, V, dtype=jnp.int32)
    targets = targets.at[0, 0].set(-100)  # exercise ignore_index masking

    mem_before = jax.random.normal(k3, (B, M, D), dtype=jnp.float32)
    mem_after = mem_before + 0.1 * jax.random.normal(k4, (B, M, D), jnp.float32)
    attn = jax.nn.softmax(jax.random.normal(k5, (B, H, Q, K), jnp.float32), axis=-1)

    loss_fn = TTMLoss(memory_loss_weight=0.1, attention_loss_weight=0.01)
    total = loss_fn(logits, targets, mem_before, mem_after, attn)
    total = jax.block_until_ready(total)

    # pure-JAX reference check
    lp = jax.nn.log_softmax(logits, axis=-1).reshape(-1, V)
    t = targets.reshape(-1)
    valid = t != -100
    nll = -jnp.take_along_axis(lp, jnp.clip(t, 0, V - 1)[:, None], axis=-1)[:, 0]
    ref_token = jnp.sum(jnp.where(valid, nll, 0.0)) / jnp.sum(valid)
    ref_mem = jnp.mean(jnp.linalg.norm(mem_after - mem_before, axis=-1)) * 0.1
    ref_attn = jnp.mean(-jnp.sum(attn * jnp.log(attn + 1e-10), axis=-1)) * 0.01
    ref_total = ref_token + ref_mem + ref_attn
    assert jnp.allclose(total, ref_total, rtol=1e-3, atol=1e-4), (total, ref_total)

    # bf16 inputs go straight into the kernels (no wrapper upcast pass)
    total_bf16 = loss_fn(logits.astype(jnp.bfloat16), targets,
                         mem_before.astype(jnp.bfloat16),
                         mem_after.astype(jnp.bfloat16),
                         attn.astype(jnp.bfloat16))
    total_bf16 = jax.block_until_ready(total_bf16)
    assert bool(jnp.isfinite(total_bf16)), total_bf16

    print("KERNEL_OK")
</pallas_src>

<mosaic_0001>
module attributes {stable_mosaic.version = 11 : i64} {
  func.func @_ce_kernel(%arg0: i32, %arg1: i32, %arg2: memref<16x32xf32, #tpu.memory_space<vmem>>, %arg3: memref<16x1xi32, #tpu.memory_space<vmem>>, %arg4: memref<16x1xf32, #tpu.memory_space<vmem>>, %arg5: memref<16x1xf32, #tpu.memory_space<vmem>>) attributes {dimension_semantics = [#tpu.dimension_semantics<parallel>, #tpu.dimension_semantics<arbitrary>], iteration_bounds = array<i64: 1, 1>, scalar_prefetch = 0 : i64, scratch_operands = 0 : i64, tpu.core_type = #tpu.core_type<tc>, window_params = [{transform_indices = @transform_0, window_bounds = array<i64: 16, 32>}, {transform_indices = @transform_1, window_bounds = array<i64: 16, 1>}, {transform_indices = @transform_2, window_bounds = array<i64: 16, 1>}, {transform_indices = @transform_3, window_bounds = array<i64: 16, 1>}]} {
    %c0_i32 = arith.constant 0 : i32
    %0 = arith.cmpi eq, %arg1, %c0_i32 : i32
    %1 = arith.extui %0 : i1 to i32
    %c0_i32_0 = arith.constant 0 : i32
    %2 = arith.cmpi ne, %1, %c0_i32_0 : i32
    scf.if %2 {
      %cst_23 = arith.constant 0.000000e+00 : f32
      %54 = vector.broadcast %cst_23 : f32 to vector<16x1xf32>
      %c0_24 = arith.constant 0 : index
      %c0_25 = arith.constant 0 : index
      %55 = vector.load %arg4[%c0_24, %c0_25] : memref<16x1xf32, #tpu.memory_space<vmem>>, vector<16x1xf32>
      tpu.vector_store %arg4[%c0_24, %c0_25], %54 {strides = array<i32>} : memref<16x1xf32, #tpu.memory_space<vmem>>, vector<16x1xf32>,
      %cst_26 = arith.constant 0.000000e+00 : f32
      %56 = vector.broadcast %cst_26 : f32 to vector<16x1xf32>
      %c0_27 = arith.constant 0 : index
      %c0_28 = arith.constant 0 : index
      %57 = vector.load %arg5[%c0_27, %c0_28] : memref<16x1xf32, #tpu.memory_space<vmem>>, vector<16x1xf32>
      tpu.vector_store %arg5[%c0_27, %c0_28], %56 {strides = array<i32>} : memref<16x1xf32, #tpu.memory_space<vmem>>, vector<16x1xf32>,
    } else {
    }
    %c0 = arith.constant 0 : index
    %c0_1 = arith.constant 0 : index
    %3 = vector.load %arg2[%c0, %c0_1] : memref<16x32xf32, #tpu.memory_space<vmem>>, vector<16x32xf32>
    %c0_2 = arith.constant 0 : index
    %c0_3 = arith.constant 0 : index
    %4 = vector.load %arg3[%c0_2, %c0_3] : memref<16x1xi32, #tpu.memory_space<vmem>>, vector<16x1xi32>
    %c1_i32 = arith.constant 1 : i32
    %5 = arith.muli %arg0, %c1_i32 : i32
    %6 = arith.addi %5, %arg1 : i32
    %c16_i32 = arith.constant 16 : i32
    %7 = arith.muli %6, %c16_i32 : i32
    %8 = tpu.iota {dimensions = array<i32: 0>} : vector<16x1xi32>
    %9 = vector.broadcast %7 : i32 to vector<16x1xi32>
    %10 = arith.addi %9, %8 : vector<16x1xi32>
    %c16_i32_4 = arith.constant 16 : i32
    %11 = vector.broadcast %c16_i32_4 : i32 to vector<16x1xi32>
    %12 = arith.cmpi slt, %10, %11 : vector<16x1xi32>
    %c-100_i32 = arith.constant -100 : i32
    %13 = vector.broadcast %c-100_i32 : i32 to vector<16x1xi32>
    %14 = arith.cmpi ne, %4, %13 : vector<16x1xi32>
    %15 = arith.andi %12, %14 : vector<16x1xi1>
    %cst = arith.constant dense<0xFF800000> : vector<16xf32>
    %16 = vector.multi_reduction <maximumf>, %3, %cst [1] : vector<16x32xf32> to vector<16xf32>
    %17 = vector.shape_cast %16 : vector<16xf32> to vector<16x1xf32>
    %18 = vector.broadcast %17 : vector<16x1xf32> to vector<16x32xf32>
    %19 = arith.subf %3, %18 : vector<16x32xf32>
    %20 = math.exp %19 : vector<16x32xf32>
    %cst_5 = arith.constant dense<0.000000e+00> : vector<16xf32>
    %21 = vector.multi_reduction <add>, %20, %cst_5 [1] : vector<16x32xf32> to vector<16xf32>
    %22 = vector.shape_cast %21 : vector<16xf32> to vector<16x1xf32>
    %23 = math.log %22 : vector<16x1xf32>
    %24 = arith.addf %17, %23 : vector<16x1xf32>
    %25 = tpu.iota {dimensions = array<i32: 1>} : vector<16x32xi32>
    %26 = vector.broadcast %4 : vector<16x1xi32> to vector<16x32xi32>
    %27 = arith.cmpi eq, %25, %26 : vector<16x32xi32>
    %cst_6 = arith.constant 0.000000e+00 : f32
    %28 = vector.broadcast %cst_6 : f32 to vector<16x32xf32>
    %29 = arith.select %27, %3, %28 : vector<16x32xi1>, vector<16x32xf32>
    %cst_7 = arith.constant dense<0.000000e+00> : vector<16xf32>
    %30 = vector.multi_reduction <add>, %29, %cst_7 [1] : vector<16x32xf32> to vector<16xf32>
    %31 = vector.shape_cast %30 : vector<16xf32> to vector<16x1xf32>
    %32 = arith.subf %24, %31 : vector<16x1xf32>
    %cst_8 = arith.constant dense<0.000000e+00> : vector<16xf32>
    %33 = vector.multi_reduction <add>, %3, %cst_8 [1] : vector<16x32xf32> to vector<16xf32>
    %34 = vector.shape_cast %33 : vector<16xf32> to vector<16x1xf32>
    %cst_9 = arith.constant 3.200000e+01 : f32
    %35 = vector.broadcast %cst_9 : f32 to vector<16x1xf32>
    %36 = arith.divf %34, %35 : vector<16x1xf32>
    %37 = arith.subf %24, %36 : vector<16x1xf32>
    %cst_10 = arith.constant 1.000000e+00 : f32
    %38 = vector.broadcast %cst_10 : f32 to vector<16x1xf32>
    %39 = arith.mulf %38, %32 : vector<16x1xf32>
    %cst_11 = arith.constant 0.000000e+00 : f32
    %40 = vector.broadcast %cst_11 : f32 to vector<16x1xf32>
    %41 = arith.mulf %40, %37 : vector<16x1xf32>
    %42 = arith.addf %39, %41 : vector<16x1xf32>
    %c0_12 = arith.constant 0 : index
    %c0_13 = arith.constant 0 : index
    %43 = vector.load %arg4[%c0_12, %c0_13] : memref<16x1xf32, #tpu.memory_space<vmem>>, vector<16x1xf32>
    %cst_14 = arith.constant 0.000000e+00 : f32
    %44 = vector.broadcast %cst_14 : f32 to vector<16x1xf32>
    %45 = arith.select %15, %42, %44 : vector<16x1xi1>, vector<16x1xf32>
    %46 = arith.addf %43, %45 : vector<16x1xf32>
    %c0_15 = arith.constant 0 : index
    %c0_16 = arith.constant 0 : index
    %47 = vector.load %arg4[%c0_15, %c0_16] : memref<16x1xf32, #tpu.memory_space<vmem>>, vector<16x1xf32>
    tpu.vector_store %arg4[%c0_15, %c0_16], %46 {strides = array<i32>} : memref<16x1xf32, #tpu.memory_space<vmem>>, vector<16x1xf32>,
    %c0_17 = arith.constant 0 : index
    %c0_18 = arith.constant 0 : index
    %48 = vector.load %arg5[%c0_17, %c0_18] : memref<16x1xf32, #tpu.memory_space<vmem>>, vector<16x1xf32>
    %cst_19 = arith.constant 1.000000e+00 : f32
    %cst_20 = arith.constant 0.000000e+00 : f32
    %49 = vector.broadcast %cst_19 : f32 to vector<16x1xf32>
    %50 = vector.broadcast %cst_20 : f32 to vector<16x1xf32>
    %51 = arith.select %15, %49, %50 : vector<16x1xi1>, vector<16x1xf32>
    %52 = arith.addf %48, %51 : vector<16x1xf32>
    %c0_21 = arith.constant 0 : index
    %c0_22 = arith.constant 0 : index
    %53 = vector.load %arg5[%c0_21, %c0_22] : memref<16x1xf32, #tpu.memory_space<vmem>>, vector<16x1xf32>
    tpu.vector_store %arg5[%c0_21, %c0_22], %52 {strides = array<i32>} : memref<16x1xf32, #tpu.memory_space<vmem>>, vector<16x1xf32>,
    return
  }
  func.func @transform_0(%arg0: i32, %arg1: i32) -> (i32, i32) {
    %c1_i32 = arith.constant 1 : i32
    %0 = arith.muli %arg0, %c1_i32 : i32
    %1 = arith.addi %0, %arg1 : i32
    %c0_i32 = arith.constant 0 : i32
    %2 = arith.minsi %1, %c0_i32 : i32
    %c0_i32_0 = arith.constant 0 : i32
    %c0_i32_1 = arith.constant 0 : i32
    return %2, %c0_i32_0 : i32, i32
  }
  func.func @transform_1(%arg0: i32, %arg1: i32) -> (i32, i32) {
    %c1_i32 = arith.constant 1 : i32
    %0 = arith.muli %arg0, %c1_i32 : i32
    %1 = arith.addi %0, %arg1 : i32
    %c0_i32 = arith.constant 0 : i32
    %2 = arith.minsi %1, %c0_i32 : i32
    %c0_i32_0 = arith.constant 0 : i32
    %c0_i32_1 = arith.constant 0 : i32
    return %2, %c0_i32_0 : i32, i32
  }
  func.func @transform_2(%arg0: i32, %arg1: i32) -> (i32, i32) {
    %c0_i32 = arith.constant 0 : i32
    %c0_i32_0 = arith.constant 0 : i32
    return %arg0, %c0_i32 : i32, i32
  }
  func.func @transform_3(%arg0: i32, %arg1: i32) -> (i32, i32) {
    %c0_i32 = arith.constant 0 : i32
    %c0_i32_0 = arith.constant 0 : i32
    return %arg0, %c0_i32 : i32, i32
  }
}

</mosaic_0001>

<llo_original>
// kernel: tpu_custom_call.1
$region0: #{tpu_custom_call.1}
  #allocation0 [shape = 'u32[]', space=smem, size = 0x4, offset = 0x4, fixed_abs, tag = 'smem constant byte address 0x4 - core index']
  #allocation1 [shape = 'u32[144,128]{1,0:T(1,128)}', space=vmem, size = 0x12000, scoped, tag = 'internal scratch']
  %s0 = inlined_call_operand.vmem [shape: f32[16,32], index: 0, kind: input, shape index: {}]
  %s1 = inlined_call_operand.vmem [shape: s32[16,1], index: 1, kind: input, shape index: {}]
  %s2 = inlined_call_operand.vmem [shape: f32[16,1], index: 2, kind: output, shape index: {0}]
  %s3 = inlined_call_operand.vmem [shape: f32[16,1], index: 3, kind: output, shape index: {1}]
  %4 = xla_tuple %s2, %s3
  %s5 = sld [smem:[#allocation0]]
  $region30: #{tpu_custom_call.1} parent=0
    _
  %s7 = ssub.s32 1, %s5
  %s8 = scalar_select 0, %s7, %s5
  // Predicated region
  $region2: #{tpu_custom_call.1} parent=0 // pred_check
    _
  $region3: #{tpu_custom_call.1} parent=0 // pred_check_branch
    %10 = sbr.rel (0) target = $region5
  $region4: #{tpu_custom_call.1} parent=0 // pred_region
    %s11 = sadd.s32 0, 0
    %p12 = scmp.lt.s32.totalorder %s11, 0
    %s13 = scalar_select %p12, %s11, 0
    %s14 = smul.u32 2, %s13
    %p15 = scmp.lt.s32.totalorder %s14, 1
    %s16 = scalar_select %p15, %s14, 1
    %s17 = smul.addr %s16, 8
    %s18 = scalar_lea.vmem %s0, %s17
    %s19 = sadd.s32 0, 0
    %p20 = scmp.lt.s32.totalorder %s19, 0
    %s21 = scalar_select %p20, %s19, 0
    %s22 = smul.u32 2, %s21
  $region5: #{tpu_custom_call.1} parent=0 // pred_fallthru
    _
  // Predicated region
  $region6: #{tpu_custom_call.1} parent=0 // pred_check
    _
  $region7: #{tpu_custom_call.1} parent=0 // pred_check_branch
    %24 = sbr.rel (0) target = $region9
  $region8: #{tpu_custom_call.1} parent=0 // pred_region
    %s25 = sadd.s32 0, 0
    %p26 = scmp.lt.s32.totalorder %s25, 0
    %s27 = scalar_select %p26, %s25, 0
    %s28 = smul.u32 2, %s27
    %p29 = scmp.lt.s32.totalorder %s28, 1
    %s30 = scalar_select %p29, %s28, 1
    %s31 = smul.addr %s30, 8
    %s32 = scalar_lea.vmem %s1, %s31
    %s33 = sadd.s32 0, 0
    %p34 = scmp.lt.s32.totalorder %s33, 0
    %s35 = scalar_select %p34, %s33, 0
    %s36 = smul.u32 2, %s35
  $region9: #{tpu_custom_call.1} parent=0 // pred_fallthru
    _
  %s37 = sadd.s32 0, 0
  %p38 = scmp.lt.s32.totalorder %s37, 0
  %s39 = scalar_select %p38, %s37, 0
  %s40 = smul.u32 2, %s39
  %p41 = scmp.lt.s32.totalorder %s40, 1
  %s42 = scalar_select %p41, %s40, 1
  %s43 = smul.addr %s42, 8
  %s44 = scalar_lea.vmem %s0, %s43
  %s45 = sadd.s32 0, 0
  %p46 = scmp.lt.s32.totalorder %s45, 0
  %s47 = scalar_select %p46, %s45, 0
  %s48 = smul.u32 2, %s47
  %p49 = scmp.lt.s32.totalorder %s48, 1
  %s50 = scalar_select %p49, %s48, 1
  %s51 = smul.addr %s50, 8
  %s52 = scalar_lea.vmem %s1, %s51
  %s53 = sadd.s32 0, 0
  %p54 = scmp.lt.s32.totalorder %s53, 0
  %s55 = scalar_select %p54, %s53, 0
  %s56 = smul.u32 2, %s55
  %p57 = scmp.lt.s32.totalorder %s56, 1
  %s58 = scalar_select %p57, %s56, 1
  %s59 = smul.addr %s58, 8
  %s60 = scalar_lea.vmem %s0, %s59
  %s61 = sadd.s32 0, 0
  %p62 = scmp.lt.s32.totalorder %s61, 0
  %s63 = scalar_select %p62, %s61, 0
  %s64 = smul.u32 2, %s63
  %s65 = sadd.s32 0, 0
  %p66 = scmp.lt.s32.totalorder %s65, 0
  %s67 = scalar_select %p66, %s65, 0
  %s68 = smul.u32 2, %s67
  %p69 = scmp.lt.s32.totalorder %s68, 1
  %s70 = scalar_select %p69, %s68, 1
  %s71 = smul.addr %s70, 8
  %s72 = scalar_lea.vmem %s1, %s71
  %s73 = sadd.s32 0, 0
  %p74 = scmp.lt.s32.totalorder %s73, 0
  %s75 = scalar_select %p74, %s73, 0
  %s76 = smul.u32 2, %s75
  %p77 = scmp.eq.s32.totalorder 0, 0
  // Predicated region
  $region10: #{tpu_custom_call.1} parent=0 // pred_check
    %p78 = pneg %p77
  $region11: #{tpu_custom_call.1} parent=0 // pred_check_branch
    %80 = sbr.rel (%p78) target = $region13
  $region12: #{tpu_custom_call.1} parent=0 // pred_region
    %vm81 = vcmask 7168
    %82 = vst.msk [vmem:[%s2] sm:$0xff] %vm81, 0.0
    %83 = vst.msk [vmem:[%s2 + $0x8] sm:$0xff] %vm81, 0.0
    %84 = vst.msk [vmem:[%s3] sm:$0xff] %vm81, 0.0
    %85 = vst.msk [vmem:[%s3 + $0x8] sm:$0xff] %vm81, 0.0
  $region13: #{tpu_custom_call.1} parent=0 // pred_fallthru
    _
  %v86 = vld [vmem:[%s60] sm:$0xff]
  %v87 = vld [vmem:[%s60 + $0x8] sm:$0xff]
  %v88 = vld [vmem:[%s72] sm:$0xff]
  %v89 = vld [vmem:[%s72 + $0x8] sm:$0xff]
  %s90 = sadd.s32 0, 0
  %s91 = smul.u32 %s90, 16
  %v92 = vlaneseq
  %v93 = vshrl.u32 %v92, 7
  %v94 = vadd.s32 %v93, 8
  %v95 = vstv %s91
  %v96 = vadd.s32 %v95, %v93
  %v97 = vadd.s32 %v95, %v94
  %vm98 = vcmp.lt.s32.totalorder %v96, 16
  %vm99 = vcmp.lt.s32.totalorder %v97, 16
  %vm100 = vcmp.ne.s32.totalorder %v88, 4294967196
  %vm101 = vcmp.ne.s32.totalorder %v89, 4294967196
  %vm102 = vmand %vm98, %vm100
  %vm103 = vmand %vm99, %vm101
  %vm104 = vcmask 261120
  %v105 = vsel %vm104, %v86, -inf
  %106 = vmax.xlane.f32.xlu0 %v105
  %v107 = vpop.xlane.xlu0 %106
  %v108 = vsel %vm104, %v87, -inf
  %109 = vmax.xlane.f32.xlu0 %v108
  %v110 = vpop.xlane.xlu0 %109
  %v111 = vsub.f32 %v86, %v107
  %v112 = vsub.f32 %v87, %v110
  %v113 = vmul.f32 %v111, 1.442695
  %v114 = vpow.pop %v113
  %v115 = vmul.f32 %v112, 1.442695
  %v116 = vpow.pop %v115
  %v117 = vsel %vm104, %v114, 0.0
  %118 = vadd.xlane.f32.xlu0 %v117
  %v119 = vpop.xlane.xlu0 %118
  %v120 = vsel %vm104, %v116, 0.0
  %121 = vadd.xlane.f32.xlu0 %v120
  %v122 = vpop.xlane.xlu0 %121
  %v123 = vlog2.pop %v119
  %v124 = vmul.f32 %v123, 0.6931472
  %v125 = vlog2.pop %v122
  %v126 = vmul.f32 %v125, 0.6931472
  %v127 = vadd.f32 %v107, %v124
  %v128 = vadd.f32 %v110, %v126
  %v129 = vlaneseq
  %v130 = vand.u32 %v129, 127
  %131 = vset.pattern.permute.xlu0 0
  %132 = vperm.xlu0 %131, %v88
  %v133 = vpop.permute.xlu0 %132
  %134 = vset.pattern.permute.xlu0 0
  %135 = vperm.xlu0 %134, %v89
  %v136 = vpop.permute.xlu0 %135
  %vm137 = vcmp.eq.s32.totalorder %v130, %v133
  %vm138 = vcmp.eq.s32.totalorder %v130, %v136
  %v139 = vsel %vm137, %v86, 0.0
  %v140 = vsel %vm138, %v87, 0.0
  %v141 = vsel %vm104, %v139, 0.0
  %142 = vadd.xlane.f32.xlu0 %v141
  %v143 = vpop.xlane.xlu0 %142
  %v144 = vsel %vm104, %v140, 0.0
  %145 = vadd.xlane.f32.xlu0 %v144
  %v146 = vpop.xlane.xlu0 %145
  %v147 = vsub.f32 %v127, %v143
  %v148 = vsub.f32 %v128, %v146
  %v149 = vsel %vm104, %v86, 0.0
  %150 = vadd.xlane.f32.xlu0 %v149
  %v151 = vpop.xlane.xlu0 %150
  %v152 = vsel %vm104, %v87, 0.0
  %153 = vadd.xlane.f32.xlu0 %v152
  %v154 = vpop.xlane.xlu0 %153
  %v155 = vrcp.pop 32.0
  %v156 = vmul.f32 %v151, %v155
  %v157 = vmul.f32 %v154, %v155
  %v158 = vsub.f32 %v127, %v156
  %v159 = vsub.f32 %v128, %v157
  %v160 = vmul.f32 %v158, 0.0
  %v161 = vmul.f32 %v159, 0.0
  %v162 = vadd.f32 %v147, %v160
  %v163 = vadd.f32 %v148, %v161
  %v164 = vld [vmem:[%s2] sm:$0xff]
  %v165 = vld [vmem:[%s2 + $0x8] sm:$0xff]
  %v166 = vsel %vm102, %v162, 0.0
  %v167 = vsel %vm103, %v163, 0.0
  %v168 = vadd.f32 %v164, %v166
  %v169 = vadd.f32 %v165, %v167
  %vm170 = vcmask 7168
  %171 = vst.msk [vmem:[%s2] sm:$0xff] %vm170, %v168
  %172 = vst.msk [vmem:[%s2 + $0x8] sm:$0xff] %vm170, %v169
  %v173 = vld [vmem:[%s3] sm:$0xff]
  %v174 = vld [vmem:[%s3 + $0x8] sm:$0xff]
  %v175 = vsel %vm102, 1.0, 0.0
  %v176 = vsel %vm103, 1.0, 0.0
  %v177 = vadd.f32 %v173, %v175
  %v178 = vadd.f32 %v174, %v176
  %179 = vst.msk [vmem:[%s3] sm:$0xff] %vm170, %v177
  %180 = vst.msk [vmem:[%s3 + $0x8] sm:$0xff] %vm170, %v178
  // Predicated region
  $region14: #{tpu_custom_call.1} parent=0 // pred_check
    _
  $region15: #{tpu_custom_call.1} parent=0 // pred_check_branch
    %182 = sbr.rel (0) target = $region17
  $region16: #{tpu_custom_call.1} parent=0 // pred_region
    _
  $region17: #{tpu_custom_call.1} parent=0 // pred_fallthru
    _
  // Predicated region
  $region18: #{tpu_custom_call.1} parent=0 // pred_check
    _
  $region19: #{tpu_custom_call.1} parent=0 // pred_check_branch
    %184 = sbr.rel (0) target = $region21
  $region20: #{tpu_custom_call.1} parent=0 // pred_region
    _
  $region21: #{tpu_custom_call.1} parent=0 // pred_fallthru
    _
  // Predicated region
  $region22: #{tpu_custom_call.1} parent=0 // pred_check
    _
  $region23: #{tpu_custom_call.1} parent=0 // pred_check_branch
    %186 = sbr.rel (0) target = $region25
  $region24: #{tpu_custom_call.1} parent=0 // pred_region
    _
  $region25: #{tpu_custom_call.1} parent=0 // pred_fallthru
    _
  // Predicated region
  $region26: #{tpu_custom_call.1} parent=0 // pred_check
    _
  $region27: #{tpu_custom_call.1} parent=0 // pred_check_branch
    %188 = sbr.rel (0) target = $region29
  $region28: #{tpu_custom_call.1} parent=0 // pred_region
    _
  $region29: #{tpu_custom_call.1} parent=0 // pred_fallthru
    _

</llo_original>
